<compile_context>
chip_gen: v6e
topology: v6e:2x2x1
jax: 0.10.0
libtpu: 0.0.40
codegen_flags: <defaults>
</compile_context>

<pallas_src>
import jax
import jax.numpy as jnp
from jax import lax
from jax.experimental import pallas as pl
from jax.experimental.pallas import tpu as pltpu

_LANE = 128


def _round_up(n, m):
    return ((n + m - 1) // m) * m


def _choose_tb(B, tb_req):
    # Guard: lane-width blocks must be a multiple of 128 on every generation.
    tb = max(_LANE, (int(tb_req) // _LANE) * _LANE)
    # Never bigger than the lane-rounded batch (avoids wasted pad for small B).
    tb = min(tb, _round_up(B, _LANE))
    # Keep >= 2 grid tiles when the batch can be split, so the ("parallel",)
    # grid axis can be sharded across both TensorCores on v7x.
    if B >= 2 * _LANE:
        tb = min(tb, _round_up(-(-B // 2), _LANE))
    return tb


def fnn_kernel(x_ref, w1_ref, b1_ref, w2_ref, b2_ref, o_ref):
    # x : (TB, K) f32, natural PyTorch layout (ragged tail rows may contain
    #     stale/zero padding; their results land in padded output lanes that
    #     the wrapper slices off — do NOT reduce over the lane axis).
    # w1: (H, K)  bf16   b1: (H, 1) f32   w2: (H, 1) f32   b2: (1, 1) f32 SMEM
    # o : (1, TB) f32 lane-dense (batch on the lane axis -> unmasked stores).
    xb = x_ref[...].astype(jnp.bfloat16)                       # cheap VPU cast
    # h_T[r, c] = sum_k w1[r, k] * x[c, k]   -> (H, TB), fp32 MXU accumulation.
    h = jnp.dot(w1_ref[...], xb.T, preferred_element_type=jnp.float32)
    h = jnp.maximum(h + b1_ref[...], 0.0)                      # bias + ReLU, f32
    # fc2 (H -> 1): f32 VPU multiply + sublane reduce (no MXU M=1 push, no
    # intermediate bf16 rounding stage).
    y = jnp.sum(h * w2_ref[...], axis=0, keepdims=True)        # (1, TB)
    o_ref[...] = (y + b2_ref[0, 0]).astype(o_ref.dtype)


def fnn_forward(x, w1, b1, w2, b2, *, tb=8192):
    """Forward pass of FNN.

    x : (B, 40) float32           (PyTorch (N, in_features) convention)
    w1: (128, 40), b1: (128,)     (PyTorch fc1.weight / fc1.bias layout)
    w2: (1, 128),  b2: (1,)       (PyTorch fc2.weight / fc2.bias layout)
    returns (B, 1) float32
    """
    B, K = x.shape
    H = w1.shape[0]

    tb = _choose_tb(B, tb)
    n_tiles = pl.cdiv(B, tb)
    B_out = n_tiles * tb          # lane-dense output slab width (all full blocks)

    # Only tiny batches (B < tb, i.e. B < 256) get zero-padded so the single
    # block never exceeds the array; large batches stream unpadded and the
    # ragged last block is handled by Pallas boundary-block clamping/masking.
    x_in = x if B >= tb else jnp.zeros((tb, K), x.dtype).at[:B, :].set(x)

    # Tiny resident operands (a few KB): weights bf16 for the MXU, biases and
    # the fc2 column in f32.
    w1b = w1.astype(jnp.bfloat16)                 # (H, K)
    b1c = b1.reshape(H, 1).astype(jnp.float32)    # (H, 1)
    w2c = w2.reshape(H, 1).astype(jnp.float32)    # (H, 1), f32 for VPU fc2
    b2c = b2.reshape(1, 1).astype(jnp.float32)    # SMEM scalar

    flops = 2 * B_out * K * H + 4 * B_out * H
    bytes_accessed = (x_in.size * 4 + w1b.size * 2 + b1c.size * 4
                      + w2c.size * 4 + 4 + B_out * 4)

    out = pl.pallas_call(
        fnn_kernel,
        out_shape=jax.ShapeDtypeStruct((1, B_out), jnp.float32),
        grid=(n_tiles,),
        in_specs=[
            pl.BlockSpec((tb, K), lambda i: (i, 0)),      # x: streamed, natural
            pl.BlockSpec((H, K), lambda i: (0, 0)),       # w1: resident
            pl.BlockSpec((H, 1), lambda i: (0, 0)),       # b1: resident
            pl.BlockSpec((H, 1), lambda i: (0, 0)),       # w2: resident
            pl.BlockSpec(memory_space=pltpu.MemorySpace.SMEM),  # b2 scalar
        ],
        out_specs=pl.BlockSpec((1, tb), lambda i: (0, i)),  # lane-dense output
        compiler_params=pltpu.CompilerParams(
            dimension_semantics=("parallel",)),             # megacore on v7x
        cost_estimate=pl.CostEstimate(
            flops=flops, transcendentals=0, bytes_accessed=bytes_accessed),
    )(x_in, w1b, b1c, w2c, b2c)

    # (1, B_out) lane-dense slab -> (B, 1) PyTorch-shaped output.
    return out[0, :B].reshape(B, 1).astype(x.dtype)


def fnn_reference(x, w1, b1, w2, b2):
    h = jnp.maximum(x @ w1.T + b1, 0.0)
    return h @ w2.T + b2


def init_params(key):
    # PyTorch nn.Linear default init: U(-1/sqrt(fan_in), 1/sqrt(fan_in)),
    # weights stored in PyTorch (out_features, in_features) layout.
    k1, k2, k3, k4 = jax.random.split(key, 4)
    bound1 = 1.0 / jnp.sqrt(40.0)
    bound2 = 1.0 / jnp.sqrt(128.0)
    w1 = jax.random.uniform(k1, (128, 40), jnp.float32, -bound1, bound1)
    b1 = jax.random.uniform(k2, (128,), jnp.float32, -bound1, bound1)
    w2 = jax.random.uniform(k3, (1, 128), jnp.float32, -bound2, bound2)
    b2 = jax.random.uniform(k4, (1,), jnp.float32, -bound2, bound2)
    return w1, b1, w2, b2


if __name__ == "__main__":
    key = jax.random.PRNGKey(0)
    kx, kp = jax.random.split(key)
    w1, b1, w2, b2 = init_params(kp)

    # Case 1: multi-tile batch (2 grid steps, ragged last block).
    B = 1000
    x = jax.random.normal(kx, (B, 40), jnp.float32)
    out = fnn_forward(x, w1, b1, w2, b2)
    jax.block_until_ready(out)
    ref = fnn_reference(x, w1, b1, w2, b2)
    assert out.shape == (B, 1)
    # bf16 fc1 operands / fp32 accumulation vs. pure-fp32 reference.
    assert jnp.allclose(out, ref, atol=3e-2, rtol=3e-2), \
        float(jnp.max(jnp.abs(out - ref)))

    # Case 2: tiny batch (single tile, zero-padded small-batch path).
    B2 = 8
    x2 = jax.random.normal(jax.random.PRNGKey(1), (B2, 40), jnp.float32)
    out2 = fnn_forward(x2, w1, b1, w2, b2)
    jax.block_until_ready(out2)
    ref2 = fnn_reference(x2, w1, b1, w2, b2)
    assert out2.shape == (B2, 1)
    assert jnp.allclose(out2, ref2, atol=3e-2, rtol=3e-2), \
        float(jnp.max(jnp.abs(out2 - ref2)))

    print("KERNEL_OK")
</pallas_src>

<mosaic_0001>
module attributes {stable_mosaic.version = 11 : i64} {
  func.func @fnn_kernel(%arg0: i32, %arg1: memref<512x40xf32, #tpu.memory_space<vmem>>, %arg2: memref<128x40xbf16, #tpu.memory_space<vmem>>, %arg3: memref<128x1xf32, #tpu.memory_space<vmem>>, %arg4: memref<128x1xf32, #tpu.memory_space<vmem>>, %arg5: memref<1x1xf32, #tpu.memory_space<smem>>, %arg6: memref<1x512xf32, #tpu.memory_space<vmem>>) attributes {dimension_semantics = [#tpu.dimension_semantics<parallel>], iteration_bounds = array<i64: 2>, scalar_prefetch = 0 : i64, scratch_operands = 0 : i64, tpu.core_type = #tpu.core_type<tc>, window_params = [{transform_indices = @transform_0, window_bounds = array<i64: 512, 40>}, {pipeline_mode = #tpu.pipeline_mode<synchronous>, transform_indices = @transform_1, window_bounds = array<i64: 128, 40>}, {pipeline_mode = #tpu.pipeline_mode<synchronous>, transform_indices = @transform_2, window_bounds = array<i64: 128, 1>}, {pipeline_mode = #tpu.pipeline_mode<synchronous>, transform_indices = @transform_3, window_bounds = array<i64: 128, 1>}, {transform_indices = @transform_4, window_bounds = array<i64: 1, 1>}, {transform_indices = @transform_5, window_bounds = array<i64: 1, 512>}]} {
    %c0 = arith.constant 0 : index
    %c0_0 = arith.constant 0 : index
    %0 = vector.load %arg1[%c0, %c0_0] : memref<512x40xf32, #tpu.memory_space<vmem>>, vector<512x40xf32>
    %1 = arith.truncf %0 : vector<512x40xf32> to vector<512x40xbf16>
    %c0_1 = arith.constant 0 : index
    %c0_2 = arith.constant 0 : index
    %2 = vector.load %arg2[%c0_1, %c0_2] : memref<128x40xbf16, #tpu.memory_space<vmem>>, vector<128x40xbf16>
    %3 = tpu.transpose %1, [1, 0] : vector<512x40xbf16> -> vector<40x512xbf16>
    %cst = arith.constant dense<0.000000e+00> : vector<128x512xf32>
    %4 = tpu.matmul %2, %3, %cst {dimension_numbers = #tpu.dot_dimension_numbers<[1], [0], [0], [1], [0, 0, 1, 1], [], []>} : vector<128x40xbf16>, vector<40x512xbf16>, vector<128x512xf32> -> vector<128x512xf32>
    %c0_3 = arith.constant 0 : index
    %c0_4 = arith.constant 0 : index
    %5 = vector.load %arg3[%c0_3, %c0_4] : memref<128x1xf32, #tpu.memory_space<vmem>>, vector<128x1xf32>
    %6 = vector.broadcast %5 : vector<128x1xf32> to vector<128x512xf32>
    %7 = arith.addf %4, %6 : vector<128x512xf32>
    %cst_5 = arith.constant 0.000000e+00 : f32
    %8 = vector.broadcast %cst_5 : f32 to vector<128x512xf32>
    %9 = arith.maximumf %7, %8 : vector<128x512xf32>
    %c0_6 = arith.constant 0 : index
    %c0_7 = arith.constant 0 : index
    %10 = vector.load %arg4[%c0_6, %c0_7] : memref<128x1xf32, #tpu.memory_space<vmem>>, vector<128x1xf32>
    %11 = vector.broadcast %10 : vector<128x1xf32> to vector<128x512xf32>
    %12 = arith.mulf %9, %11 : vector<128x512xf32>
    %cst_8 = arith.constant dense<0.000000e+00> : vector<512xf32>
    %13 = vector.multi_reduction <add>, %12, %cst_8 [0] : vector<128x512xf32> to vector<512xf32>
    %14 = vector.shape_cast %13 : vector<512xf32> to vector<1x512xf32>
    %c0_9 = arith.constant 0 : index
    %c0_10 = arith.constant 0 : index
    %15 = memref.load %arg5[%c0_9, %c0_10] : memref<1x1xf32, #tpu.memory_space<smem>>
    %16 = vector.broadcast %15 : f32 to vector<1x512xf32>
    %17 = arith.addf %14, %16 : vector<1x512xf32>
    %c0_11 = arith.constant 0 : index
    %c0_12 = arith.constant 0 : index
    %18 = vector.load %arg6[%c0_11, %c0_12] : memref<1x512xf32, #tpu.memory_space<vmem>>, vector<1x512xf32>
    tpu.vector_store %arg6[%c0_11, %c0_12], %17 {strides = array<i32>} : memref<1x512xf32, #tpu.memory_space<vmem>>, vector<1x512xf32>,
    return
  }
  func.func @transform_0(%arg0: i32) -> (i32, i32) {
    %c0_i32 = arith.constant 0 : i32
    %c0_i32_0 = arith.constant 0 : i32
    return %arg0, %c0_i32 : i32, i32
  }
  func.func @transform_1(%arg0: i32) -> (i32, i32) {
    %c0_i32 = arith.constant 0 : i32
    %c0_i32_0 = arith.constant 0 : i32
    %c0_i32_1 = arith.constant 0 : i32
    return %c0_i32, %c0_i32_0 : i32, i32
  }
  func.func @transform_2(%arg0: i32) -> (i32, i32) {
    %c0_i32 = arith.constant 0 : i32
    %c0_i32_0 = arith.constant 0 : i32
    %c0_i32_1 = arith.constant 0 : i32
    return %c0_i32, %c0_i32_0 : i32, i32
  }
  func.func @transform_3(%arg0: i32) -> (i32, i32) {
    %c0_i32 = arith.constant 0 : i32
    %c0_i32_0 = arith.constant 0 : i32
    %c0_i32_1 = arith.constant 0 : i32
    return %c0_i32, %c0_i32_0 : i32, i32
  }
  func.func @transform_4(%arg0: i32) -> (i32, i32) {
    %c0_i32 = arith.constant 0 : i32
    %c0_i32_0 = arith.constant 0 : i32
    %c0_i32_1 = arith.constant 0 : i32
    return %c0_i32, %c0_i32_0 : i32, i32
  }
  func.func @transform_5(%arg0: i32) -> (i32, i32) {
    %c0_i32 = arith.constant 0 : i32
    %c0_i32_0 = arith.constant 0 : i32
    return %c0_i32, %arg0 : i32, i32
  }
}

</mosaic_0001>

<llo_original>
// kernel: tpu_custom_call.1
$region0: #{tpu_custom_call.1}
  #allocation0 [shape = 'u32[]', space=smem, size = 0x4, offset = 0x4, fixed_abs, tag = 'smem constant byte address 0x4 - core index']
  #allocation1 [shape = 'u32[144,128]{1,0:T(1,128)}', space=vmem, size = 0x12000, scoped, tag = 'internal scratch']
  #allocation2 [shape = 'f32[1,1]{1,0:T(1,128)S(6)}', space=smem, size = 0x200, scoped, tag = 'scoped memory for tpu_custom_call.1']
  %s0 = inlined_call_operand.vmem [shape: f32[1000,40], index: 0, kind: input, shape index: {}]
  %s1 = inlined_call_operand.vmem [shape: bf16[128,40], index: 1, kind: input, shape index: {}]
  %s2 = inlined_call_operand.vmem [shape: f32[128,1], index: 2, kind: input, shape index: {}]
  %s3 = inlined_call_operand.vmem [shape: f32[128,1], index: 3, kind: input, shape index: {}]
  %s4 = inlined_call_operand.<no memory space> [shape: f32[1,1], index: 4, kind: input, shape index: {}]
  %s5 = inlined_call_operand.hbm [shape: f32[1,1024], index: 5, kind: output, shape index: {}]
  %s6 = sld [smem:[#allocation0]]
  $region53: #{tpu_custom_call.1} parent=0
    _
  %s8 = ssub.s32 1, %s6
  %s9 = scalar_select 0, %s8, %s6
  %10 = sst [smem:[#allocation2]] %s4
  $region1: #{tpu_custom_call.1} parent=0
    #allocation3 [shape = 'u8[4096]{0}', space=vmem, size = 0x1000, scoped, tag = 'output window, operand 0']
    #allocation4 [shape = 's32[2]{0}', space=sflag, size = 0x8, scoped, tag = 'scoped memory for tpu_custom_call.1']
    %11 = vsyncpa [#allocation4], 0
    %s12 = scalar_lea.sflag [#allocation4], 1
    %13 = vsyncpa %s12, 0
    loop: start=0, step=1, limit=4
    $region2: #{tpu_custom_call.1} parent=1 // loop_pre_header
      _
    $region3: #{tpu_custom_call.1} parent=1 // loop_header
      %s15 = sphi 0, %s19
      %p16 = scmp.ge.s32.totalorder %s15, 4
      %s25 = sphi 0, %s27
      %s28 = sphi 0, %s25
      %s29 = sphi 0, %s28
      %s45 = sphi 0, %s29
      %s49 = sphi 0, %s49
      %s51 = sphi 0, %s49
      %s52 = sphi 0, %s51
      %s66 = sphi 0, %s52
      %s70 = sphi 0, %s70
      %s72 = sphi 0, %s70
      %s73 = sphi 0, %s72
      %s87 = sphi 0, %s73
      %s91 = sphi 0, %s91
      %s93 = sphi 0, %s91
      %s94 = sphi 0, %s93
      %s108 = sphi 0, %s94
      %s112 = sphi 0, %s112
      %s114 = sphi 0, %s112
      %s115 = sphi 0, %s114
      %s129 = sphi 0, %s115
      %s135 = sphi 0, %s137
      %s138 = sphi 0, %s135
      %s139 = sphi 0, %s138
      %s155 = sphi 0, %s139
    $region4: #{tpu_custom_call.1} parent=1 // loop_header_branch
      %18 = sbr.rel (%p16) target = $region8
    $region5: #{tpu_custom_call.1} parent=1 // loop_body
      %s20 = ssub.s32 %s15, 1
      %s21 = ssub.s32 %s15, 2
      %s22 = sadd.s32 %s15, 1
      %s23 = ssub.s32 %s15, %s22
      %p24 = scmp.eq.s32.totalorder %s23, 0
      %s26 = sadd.s32 %s25, 1
      %s27 = scalar_select %p24, %s25, %s26
      %p30 = pneg %p24
      %p31 = scmp.eq.s32.totalorder %s15, 1
      %p32 = por %p30, %p31
      %p33 = scmp.ne.s32.totalorder %s25, %s28
      %p34 = scmp.eq.s32.totalorder %s15, 0
      %p35 = por %p33, %p34
      %p36 = scmp.ne.s32.totalorder %s25, %s28
      %p37 = scmp.eq.s32.totalorder %s20, 1
      %p38 = por %p36, %p37
      %p39 = scmp.ne.s32.totalorder %s28, %s29
      %p40 = scmp.eq.s32.totalorder %s20, 0
      %p41 = por %p39, %p40
      %p42 = scmp.ne.s32.totalorder %s28, %s29
      %p43 = scmp.eq.s32.totalorder %s21, 1
      %p44 = por %p42, %p43
      %p46 = scmp.ne.s32.totalorder %s29, %s45
      %p47 = scmp.eq.s32.totalorder %s21, 0
      %p48 = por %p46, %p47
      %s50 = sadd.s32 %s49, 1
      %p53 = scmp.eq.s32.totalorder %s15, 1
      %p54 = scmp.ne.s32.totalorder %s49, %s51
      %p55 = scmp.eq.s32.totalorder %s15, 0
      %p56 = por %p54, %p55
      %p57 = scmp.ne.s32.totalorder %s49, %s51
      %p58 = scmp.eq.s32.totalorder %s20, 1
      %p59 = por %p57, %p58
      %p60 = scmp.ne.s32.totalorder %s51, %s52
      %p61 = scmp.eq.s32.totalorder %s20, 0
      %p62 = por %p60, %p61
      %p63 = scmp.ne.s32.totalorder %s51, %s52
      %p64 = scmp.eq.s32.totalorder %s21, 1
      %p65 = por %p63, %p64
      %p67 = scmp.ne.s32.totalorder %s52, %s66
      %p68 = scmp.eq.s32.totalorder %s21, 0
      %p69 = por %p67, %p68
      %s71 = sadd.s32 %s70, 1
      %p74 = scmp.eq.s32.totalorder %s15, 1
      %p75 = scmp.ne.s32.totalorder %s70, %s72
      %p76 = scmp.eq.s32.totalorder %s15, 0
      %p77 = por %p75, %p76
      %p78 = scmp.ne.s32.totalorder %s70, %s72
      %p79 = scmp.eq.s32.totalorder %s20, 1
      %p80 = por %p78, %p79
      %p81 = scmp.ne.s32.totalorder %s72, %s73
      %p82 = scmp.eq.s32.totalorder %s20, 0
      %p83 = por %p81, %p82
      %p84 = scmp.ne.s32.totalorder %s72, %s73
      %p85 = scmp.eq.s32.totalorder %s21, 1
      %p86 = por %p84, %p85
      %p88 = scmp.ne.s32.totalorder %s73, %s87
      %p89 = scmp.eq.s32.totalorder %s21, 0
      %p90 = por %p88, %p89
      %s92 = sadd.s32 %s91, 1
      %p95 = scmp.eq.s32.totalorder %s15, 1
      %p96 = scmp.ne.s32.totalorder %s91, %s93
      %p97 = scmp.eq.s32.totalorder %s15, 0
      %p98 = por %p96, %p97
      %p99 = scmp.ne.s32.totalorder %s91, %s93
      %p100 = scmp.eq.s32.totalorder %s20, 1
      %p101 = por %p99, %p100
      %p102 = scmp.ne.s32.totalorder %s93, %s94
      %p103 = scmp.eq.s32.totalorder %s20, 0
      %p104 = por %p102, %p103
      %p105 = scmp.ne.s32.totalorder %s93, %s94
      %p106 = scmp.eq.s32.totalorder %s21, 1
      %p107 = por %p105, %p106
      %p109 = scmp.ne.s32.totalorder %s94, %s108
      %p110 = scmp.eq.s32.totalorder %s21, 0
      %p111 = por %p109, %p110
      %s113 = sadd.s32 %s112, 1
      %p116 = scmp.eq.s32.totalorder %s15, 1
      %p117 = scmp.ne.s32.totalorder %s112, %s114
      %p118 = scmp.eq.s32.totalorder %s15, 0
      %p119 = por %p117, %p118
      %p120 = scmp.ne.s32.totalorder %s112, %s114
      %p121 = scmp.eq.s32.totalorder %s20, 1
      %p122 = por %p120, %p121
      %p123 = scmp.ne.s32.totalorder %s114, %s115
      %p124 = scmp.eq.s32.totalorder %s20, 0
      %p125 = por %p123, %p124
      %p126 = scmp.ne.s32.totalorder %s114, %s115
      %p127 = scmp.eq.s32.totalorder %s21, 1
      %p128 = por %p126, %p127
      %p130 = scmp.ne.s32.totalorder %s115, %s129
      %p131 = scmp.eq.s32.totalorder %s21, 0
      %p132 = por %p130, %p131
      %s133 = ssub.s32 %s15, %s22
      %p134 = scmp.eq.s32.totalorder %s133, 0
      %s136 = sadd.s32 %s135, 1
      %s137 = scalar_select %p134, %s135, %s136
      %p140 = pneg %p134
      %p141 = scmp.eq.s32.totalorder %s15, 1
      %p142 = por %p140, %p141
      %p143 = scmp.ne.s32.totalorder %s135, %s138
      %p144 = scmp.eq.s32.totalorder %s15, 0
      %p145 = por %p143, %p144
      %p146 = scmp.ne.s32.totalorder %s135, %s138
      %p147 = scmp.eq.s32.totalorder %s20, 1
      %p148 = por %p146, %p147
      %p149 = scmp.ne.s32.totalorder %s138, %s139
      %p150 = scmp.eq.s32.totalorder %s20, 0
      %p151 = por %p149, %p150
      %p152 = scmp.ne.s32.totalorder %s138, %s139
      %p153 = scmp.eq.s32.totalorder %s21, 1
      %p154 = por %p152, %p153
      %p156 = scmp.ne.s32.totalorder %s139, %s155
      %p157 = scmp.eq.s32.totalorder %s21, 0
      %p158 = por %p156, %p157
      %p159 = scmp.le.s32.totalorder 1, %s15
      %p160 = scmp.lt.s32.totalorder %s15, 3
      %p161 = pnand %p159, %p160
      %p162 = pneg %p161
      // Predicated region
      $region9: #{tpu_custom_call.1} parent=5 // pred_check
        _
      $region10: #{tpu_custom_call.1} parent=5 // pred_check_branch
        %164 = sbr.rel (%p161) target = $region12
      $region11: #{tpu_custom_call.1} parent=5 // pred_region
        %s165 = ssub.s32 %s15, 1
        // Predicated region
        $region13: #{tpu_custom_call.1} parent=11 // pred_check
          %p166 = pneg %p62
        $region14: #{tpu_custom_call.1} parent=11 // pred_check_branch
          %168 = sbr.rel (%p166) target = $region16
        $region15: #{tpu_custom_call.1} parent=11 // pred_region
          _
        $region16: #{tpu_custom_call.1} parent=11 // pred_fallthru
          _
        // Predicated region
        $region17: #{tpu_custom_call.1} parent=11 // pred_check
          %p169 = pneg %p83
        $region18: #{tpu_custom_call.1} parent=11 // pred_check_branch
          %171 = sbr.rel (%p169) target = $region20
        $region19: #{tpu_custom_call.1} parent=11 // pred_region
          _
        $region20: #{tpu_custom_call.1} parent=11 // pred_fallthru
          _
        // Predicated region
        $region21: #{tpu_custom_call.1} parent=11 // pred_check
          %p172 = pneg %p104
        $region22: #{tpu_custom_call.1} parent=11 // pred_check_branch
          %174 = sbr.rel (%p172) target = $region24
        $region23: #{tpu_custom_call.1} parent=11 // pred_region
          _
        $region24: #{tpu_custom_call.1} parent=11 // pred_fallthru
          _
        // Predicated region
        $region25: #{tpu_custom_call.1} parent=11 // pred_check
          %p175 = pneg %p125
        $region26: #{tpu_custom_call.1} parent=11 // pred_check_branch
          %177 = sbr.rel (%p175) target = $region28
        $region27: #{tpu_custom_call.1} parent=11 // pred_region
          _
        $region28: #{tpu_custom_call.1} parent=11 // pred_fallthru
          _
      $region12: #{tpu_custom_call.1} parent=5 // pred_fallthru
        _
      %p178 = scmp.lt.s32.totalorder %s15, 2
      // Predicated region
      $region29: #{tpu_custom_call.1} parent=5 // pred_check
        %p179 = pneg %p178
      $region30: #{tpu_custom_call.1} parent=5 // pred_check_branch
        %181 = sbr.rel (%p179) target = $region32
      $region31: #{tpu_custom_call.1} parent=5 // pred_region
        // Predicated region
        $region33: #{tpu_custom_call.1} parent=31 // pred_check
          %p182 = pneg %p35
        $region34: #{tpu_custom_call.1} parent=31 // pred_check_branch
          %184 = sbr.rel (%p182) target = $region36
        $region35: #{tpu_custom_call.1} parent=31 // pred_region
          %s185 = smul.u32 64, %s15
          %s186 = ssub.s32 125, %s185
          %p187 = scmp.lt.s32.totalorder %s186, 64
          %s188 = scalar_select %p187, %s186, 64
          %s189 = smul.u32 128, %s188
          %p190 = scmp.lt.s32.totalorder %s185, 124
          %s191 = scalar_select %p190, %s185, 124
          %s192 = smul.addr %s191, 8
          %s193 = scalar_lea.vmem %s0, %s192
          %s194 = smul.u32 64, %s15
          %s195 = ssub.s32 125, %s194
          %p196 = scmp.lt.s32.totalorder %s195, 64
          %s197 = scalar_select %p196, %s195, 64
          %s198 = smul.u32 128, %s197
        $region36: #{tpu_custom_call.1} parent=31 // pred_fallthru
          _
      $region32: #{tpu_custom_call.1} parent=5 // pred_fallthru
        _
      %p199 = scmp.le.s32.totalorder 1, %s15
      %p200 = scmp.lt.s32.totalorder %s15, 3
      %p201 = pnand %p199, %p200
      %p202 = pneg %p201
      // Predicated region
      $region37: #{tpu_custom_call.1} parent=5 // pred_check
        _
      $region38: #{tpu_custom_call.1} parent=5 // pred_check_branch
        %204 = sbr.rel (%p201) target = $region40
      $region39: #{tpu_custom_call.1} parent=5 // pred_region
        %s205 = ssub.s32 %s15, 1
        %s206 = smul.u32 64, %s20
        %s207 = ssub.s32 125, %s206
        %p208 = scmp.lt.s32.totalorder %s207, 64
        %s209 = scalar_select %p208, %s207, 64
        %s210 = smul.u32 128, %s209
        %p211 = scmp.lt.s32.totalorder %s206, 124
        %s212 = scalar_select %p211, %s206, 124
        %s213 = smul.addr %s212, 8
        %s214 = scalar_lea.vmem %s0, %s213
        %p215 = pneg %p41
        %p216 = pneg %p38
        %p217 = pneg %p62
        %p218 = pneg %p59
        %p219 = pneg %p83
        %p220 = pneg %p80
        %p221 = pneg %p104
        %p222 = pneg %p101
        %p223 = pneg %p125
        %p224 = pneg %p122
        %p225 = pneg %p151
        %p226 = pneg %p148
        %s227 = sand.u32 %s138, 1
        %s228 = scalar_lea.sflag [#allocation4], %s227
        %s229 = sand.u32 %s138, 1
        %s230 = smul.addr %s229, 4
        %s231 = scalar_lea.vmem [#allocation3], %s230
        %s232 = smul.u32 64, %s20
        %s233 = ssub.s32 125, %s232
        %p234 = scmp.lt.s32.totalorder %s233, 64
        %s235 = scalar_select %p234, %s233, 64
        %s236 = smul.u32 128, %s235
        %p237 = scmp.lt.s32.totalorder %s232, 124
        %s238 = scalar_select %p237, %s232, 124
        %s239 = smul.addr %s238, 8
        %s240 = scalar_lea.vmem %s0, %s239
        %s241 = smul.u32 64, %s20
        %s242 = ssub.s32 125, %s241
        %p243 = scmp.lt.s32.totalorder %s242, 64
        %s244 = scalar_select %p243, %s242, 64
        %s245 = smul.u32 128, %s244
        %s246 = smul.u32 4, %s20
        %v248 = vld [vmem:[%s240] sm:$0xff]
        %v249 = vld [vmem:[%s240 + $0x8] sm:$0xff]
        %v250 = vld [vmem:[%s240 + $0x10] sm:$0xff]
        %v251 = vld [vmem:[%s240 + $0x18] sm:$0xff]
        %v252 = vld [vmem:[%s240 + $0x20] sm:$0xff]
        %v253 = vld [vmem:[%s240 + $0x28] sm:$0xff]
        %v254 = vld [vmem:[%s240 + $0x30] sm:$0xff]
        %v255 = vld [vmem:[%s240 + $0x38] sm:$0xff]
        %v256 = vld [vmem:[%s240 + $0x40] sm:$0xff]
        %v257 = vld [vmem:[%s240 + $0x48] sm:$0xff]
        %v258 = vld [vmem:[%s240 + $0x50] sm:$0xff]
        %v259 = vld [vmem:[%s240 + $0x58] sm:$0xff]
        %v260 = vld [vmem:[%s240 + $0x60] sm:$0xff]
        %v261 = vld [vmem:[%s240 + $0x68] sm:$0xff]
        %v262 = vld [vmem:[%s240 + $0x70] sm:$0xff]
        %v263 = vld [vmem:[%s240 + $0x78] sm:$0xff]
        %v264 = vld [vmem:[%s240 + $0x80] sm:$0xff]
        %v265 = vld [vmem:[%s240 + $0x88] sm:$0xff]
        %v266 = vld [vmem:[%s240 + $0x90] sm:$0xff]
        %v267 = vld [vmem:[%s240 + $0x98] sm:$0xff]
        %v268 = vld [vmem:[%s240 + $0xa0] sm:$0xff]
        %v269 = vld [vmem:[%s240 + $0xa8] sm:$0xff]
        %v270 = vld [vmem:[%s240 + $0xb0] sm:$0xff]
        %v271 = vld [vmem:[%s240 + $0xb8] sm:$0xff]
        %v272 = vld [vmem:[%s240 + $0xc0] sm:$0xff]
        %v273 = vld [vmem:[%s240 + $0xc8] sm:$0xff]
        %v274 = vld [vmem:[%s240 + $0xd0] sm:$0xff]
        %v275 = vld [vmem:[%s240 + $0xd8] sm:$0xff]
        %v276 = vld [vmem:[%s240 + $0xe0] sm:$0xff]
        %v277 = vld [vmem:[%s240 + $0xe8] sm:$0xff]
        %v278 = vld [vmem:[%s240 + $0xf0] sm:$0xff]
        %v279 = vld [vmem:[%s240 + $0xf8] sm:$0xff]
        %v280 = vld [vmem:[%s240 + $0x100] sm:$0xff]
        %v281 = vld [vmem:[%s240 + $0x108] sm:$0xff]
        %v282 = vld [vmem:[%s240 + $0x110] sm:$0xff]
        %v283 = vld [vmem:[%s240 + $0x118] sm:$0xff]
        %v284 = vld [vmem:[%s240 + $0x120] sm:$0xff]
        %v285 = vld [vmem:[%s240 + $0x128] sm:$0xff]
        %v286 = vld [vmem:[%s240 + $0x130] sm:$0xff]
        %v287 = vld [vmem:[%s240 + $0x138] sm:$0xff]
        %v288 = vld [vmem:[%s240 + $0x140] sm:$0xff]
        %v289 = vld [vmem:[%s240 + $0x148] sm:$0xff]
        %v290 = vld [vmem:[%s240 + $0x150] sm:$0xff]
        %v291 = vld [vmem:[%s240 + $0x158] sm:$0xff]
        %v292 = vld [vmem:[%s240 + $0x160] sm:$0xff]
        %v293 = vld [vmem:[%s240 + $0x168] sm:$0xff]
        %v294 = vld [vmem:[%s240 + $0x170] sm:$0xff]
        %v295 = vld [vmem:[%s240 + $0x178] sm:$0xff]
        %v296 = vld [vmem:[%s240 + $0x180] sm:$0xff]
        %v297 = vld [vmem:[%s240 + $0x188] sm:$0xff]
        %v298 = vld [vmem:[%s240 + $0x190] sm:$0xff]
        %v299 = vld [vmem:[%s240 + $0x198] sm:$0xff]
        %v300 = vld [vmem:[%s240 + $0x1a0] sm:$0xff]
        %v301 = vld [vmem:[%s240 + $0x1a8] sm:$0xff]
        %v302 = vld [vmem:[%s240 + $0x1b0] sm:$0xff]
        %v303 = vld [vmem:[%s240 + $0x1b8] sm:$0xff]
        %v304 = vld [vmem:[%s240 + $0x1c0] sm:$0xff]
        %v305 = vld [vmem:[%s240 + $0x1c8] sm:$0xff]
        %v306 = vld [vmem:[%s240 + $0x1d0] sm:$0xff]
        %v307 = vld [vmem:[%s240 + $0x1d8] sm:$0xff]
        %v308 = vld [vmem:[%s240 + $0x1e0] sm:$0xff]
        %v309 = vld [vmem:[%s240 + $0x1e8] sm:$0xff]
        %v310 = vld [vmem:[%s240 + $0x1f0] sm:$0xff]
        %v311 = vld [vmem:[%s240 + $0x1f8] sm:$0xff]
        %v312 = vpack.c.bf16 %v249, %v248
        %v313 = vpack.c.bf16 %v251, %v250
        %v314 = vpack.c.bf16 %v253, %v252
        %v315 = vpack.c.bf16 %v255, %v254
        %v316 = vpack.c.bf16 %v257, %v256
        %v317 = vpack.c.bf16 %v259, %v258
        %v318 = vpack.c.bf16 %v261, %v260
        %v319 = vpack.c.bf16 %v263, %v262
        %v320 = vpack.c.bf16 %v265, %v264
        %v321 = vpack.c.bf16 %v267, %v266
        %v322 = vpack.c.bf16 %v269, %v268
        %v323 = vpack.c.bf16 %v271, %v270
        %v324 = vpack.c.bf16 %v273, %v272
        %v325 = vpack.c.bf16 %v275, %v274
        %v326 = vpack.c.bf16 %v277, %v276
        %v327 = vpack.c.bf16 %v279, %v278
        %v328 = vpack.c.bf16 %v281, %v280
        %v329 = vpack.c.bf16 %v283, %v282
        %v330 = vpack.c.bf16 %v285, %v284
        %v331 = vpack.c.bf16 %v287, %v286
        %v332 = vpack.c.bf16 %v289, %v288
        %v333 = vpack.c.bf16 %v291, %v290
        %v334 = vpack.c.bf16 %v293, %v292
        %v335 = vpack.c.bf16 %v295, %v294
        %v336 = vpack.c.bf16 %v297, %v296
        %v337 = vpack.c.bf16 %v299, %v298
        %v338 = vpack.c.bf16 %v301, %v300
        %v339 = vpack.c.bf16 %v303, %v302
        %v340 = vpack.c.bf16 %v305, %v304
        %v341 = vpack.c.bf16 %v307, %v306
        %v342 = vpack.c.bf16 %v309, %v308
        %v343 = vpack.c.bf16 %v311, %v310
        %v344 = vld [vmem:[%s1] sm:$0xf]
        %v345 = vld [vmem:[%s1 + $0x4] sm:$0xf]
        %v346 = vld [vmem:[%s1 + $0x8] sm:$0xf]
        %v347 = vld [vmem:[%s1 + $0xc] sm:$0xf]
        %v348 = vld [vmem:[%s1 + $0x10] sm:$0xf]
        %v349 = vld [vmem:[%s1 + $0x14] sm:$0xf]
        %v350 = vld [vmem:[%s1 + $0x18] sm:$0xf]
        %v351 = vld [vmem:[%s1 + $0x1c] sm:$0xf]
        %v352 = vld [vmem:[%s1 + $0x20] sm:$0xf]
        %v353 = vld [vmem:[%s1 + $0x24] sm:$0xf]
        %v354 = vld [vmem:[%s1 + $0x28] sm:$0xf]
        %v355 = vld [vmem:[%s1 + $0x2c] sm:$0xf]
        %v356 = vld [vmem:[%s1 + $0x30] sm:$0xf]
        %v357 = vld [vmem:[%s1 + $0x34] sm:$0xf]
        %v358 = vld [vmem:[%s1 + $0x38] sm:$0xf]
        %v359 = vld [vmem:[%s1 + $0x3c] sm:$0xf]
        %v360 = vld [vmem:[%s2] sm:$0xff]
        %v361 = vld [vmem:[%s2 + $0x8] sm:$0xff]
        %v362 = vld [vmem:[%s2 + $0x10] sm:$0xff]
        %v363 = vld [vmem:[%s2 + $0x18] sm:$0xff]
        %v364 = vld [vmem:[%s2 + $0x20] sm:$0xff]
        %v365 = vld [vmem:[%s2 + $0x28] sm:$0xff]
        %v366 = vld [vmem:[%s2 + $0x30] sm:$0xff]
        %v367 = vld [vmem:[%s2 + $0x38] sm:$0xff]
        %v368 = vld [vmem:[%s2 + $0x40] sm:$0xff]
        %v369 = vld [vmem:[%s2 + $0x48] sm:$0xff]
        %v370 = vld [vmem:[%s2 + $0x50] sm:$0xff]
        %v371 = vld [vmem:[%s2 + $0x58] sm:$0xff]
        %v372 = vld [vmem:[%s2 + $0x60] sm:$0xff]
        %v373 = vld [vmem:[%s2 + $0x68] sm:$0xff]
        %v374 = vld [vmem:[%s2 + $0x70] sm:$0xff]
        %v375 = vld [vmem:[%s2 + $0x78] sm:$0xff]
        %377 = vset.pattern.permute.xlu0 0
        %378 = vperm.xlu0 %377, %v360
        %v379 = vpop.permute.xlu0 %378
        %382 = vset.pattern.permute.xlu0 0
        %383 = vperm.xlu0 %382, %v361
        %v384 = vpop.permute.xlu0 %383
        %387 = vset.pattern.permute.xlu0 0
        %388 = vperm.xlu0 %387, %v362
        %v389 = vpop.permute.xlu0 %388
        %392 = vset.pattern.permute.xlu0 0
        %393 = vperm.xlu0 %392, %v363
        %v394 = vpop.permute.xlu0 %393
        %397 = vset.pattern.permute.xlu0 0
        %398 = vperm.xlu0 %397, %v364
        %v399 = vpop.permute.xlu0 %398
        %402 = vset.pattern.permute.xlu0 0
        %403 = vperm.xlu0 %402, %v365
        %v404 = vpop.permute.xlu0 %403
        %407 = vset.pattern.permute.xlu0 0
        %408 = vperm.xlu0 %407, %v366
        %v409 = vpop.permute.xlu0 %408
        %412 = vset.pattern.permute.xlu0 0
        %413 = vperm.xlu0 %412, %v367
        %v414 = vpop.permute.xlu0 %413
        %417 = vset.pattern.permute.xlu0 0
        %418 = vperm.xlu0 %417, %v368
        %v419 = vpop.permute.xlu0 %418
        %422 = vset.pattern.permute.xlu0 0
        %423 = vperm.xlu0 %422, %v369
        %v424 = vpop.permute.xlu0 %423
        %427 = vset.pattern.permute.xlu0 0
        %428 = vperm.xlu0 %427, %v370
        %v429 = vpop.permute.xlu0 %428
        %432 = vset.pattern.permute.xlu0 0
        %433 = vperm.xlu0 %432, %v371
        %v434 = vpop.permute.xlu0 %433
        %437 = vset.pattern.permute.xlu0 0
        %438 = vperm.xlu0 %437, %v372
        %v439 = vpop.permute.xlu0 %438
        %442 = vset.pattern.permute.xlu0 0
        %443 = vperm.xlu0 %442, %v373
        %v444 = vpop.permute.xlu0 %443
        %447 = vset.pattern.permute.xlu0 0
        %448 = vperm.xlu0 %447, %v374
        %v449 = vpop.permute.xlu0 %448
        %452 = vset.pattern.permute.xlu0 0
        %453 = vperm.xlu0 %452, %v375
        %v454 = vpop.permute.xlu0 %453
        %v472 = vunpack.c.l.b16 %v344
        %v473 = vunpack.c.l.b16 %v345
        %v474 = vunpack.c.l.b16 %v346
        %v475 = vunpack.c.l.b16 %v347
        %v476 = vunpack.c.l.b16 %v348
        %v477 = vunpack.c.l.b16 %v349
        %v478 = vunpack.c.l.b16 %v350
        %v479 = vunpack.c.l.b16 %v351
        %v480 = vunpack.c.l.b16 %v352
        %v481 = vunpack.c.l.b16 %v353
        %v482 = vunpack.c.l.b16 %v354
        %v483 = vunpack.c.l.b16 %v355
        %v484 = vunpack.c.l.b16 %v356
        %v485 = vunpack.c.l.b16 %v357
        %v486 = vunpack.c.l.b16 %v358
        %v487 = vunpack.c.l.b16 %v359
        %v488 = vpack.c.b16 %v473, %v472
        %v489 = vpack.c.b16 %v475, %v474
        %v490 = vpack.c.b16 %v477, %v476
        %v491 = vpack.c.b16 %v479, %v478
        %v492 = vpack.c.b16 %v481, %v480
        %v493 = vpack.c.b16 %v483, %v482
        %v494 = vpack.c.b16 %v485, %v484
        %v495 = vpack.c.b16 %v487, %v486
        %vm496 = vcmask 326656
        %v498 = vsel %vm496, %v488, 0
        %v501 = vsel %vm496, %v489, 0
        %v504 = vsel %vm496, %v490, 0
        %v507 = vsel %vm496, %v491, 0
        %v510 = vsel %vm496, %v492, 0
        %v513 = vsel %vm496, %v493, 0
        %v516 = vsel %vm496, %v494, 0
        %v519 = vsel %vm496, %v495, 0
        %v522 = vsel %vm496, %v312, 0
        %v525 = vsel %vm496, %v313, 0
        %v528 = vsel %vm496, %v314, 0
        %v531 = vsel %vm496, %v315, 0
        %v534 = vsel %vm496, %v316, 0
        %v537 = vsel %vm496, %v317, 0
        %v540 = vsel %vm496, %v318, 0
        %v543 = vsel %vm496, %v319, 0
        %v546 = vsel %vm496, %v320, 0
        %v549 = vsel %vm496, %v321, 0
        %v552 = vsel %vm496, %v322, 0
        %v555 = vsel %vm496, %v323, 0
        %v558 = vsel %vm496, %v324, 0
        %v561 = vsel %vm496, %v325, 0
        %v564 = vsel %vm496, %v326, 0
        %v567 = vsel %vm496, %v327, 0
        %v570 = vsel %vm496, %v328, 0
        %v573 = vsel %vm496, %v329, 0
        %v576 = vsel %vm496, %v330, 0
        %v579 = vsel %vm496, %v331, 0
        %v582 = vsel %vm496, %v332, 0
        %v585 = vsel %vm496, %v333, 0
        %v588 = vsel %vm496, %v334, 0
        %v591 = vsel %vm496, %v335, 0
        %v594 = vsel %vm496, %v336, 0
        %v597 = vsel %vm496, %v337, 0
        %v600 = vsel %vm496, %v338, 0
        %v603 = vsel %vm496, %v339, 0
        %v606 = vsel %vm496, %v340, 0
        %v609 = vsel %vm496, %v341, 0
        %v612 = vsel %vm496, %v342, 0
        %v615 = vsel %vm496, %v343, 0
        %617 = vmatprep.subr.bf16.mxu0 0
        %618 = vmatpush1.bf16.xpose.msra.mxu0 %v543
        %619 = vmatprep.subr.bf16.mxu0 0
        %620 = vmatpush1.bf16.xpose.msra.mxu0 %v540
        %621 = vmatprep.subr.bf16.mxu0 0
        %622 = vmatpush1.bf16.xpose.msra.mxu0 %v537
        %623 = vmatprep.subr.bf16.mxu0 0
        %624 = vmatpush1.bf16.xpose.msra.mxu0 %v534
        %625 = vmatprep.subr.bf16.mxu0 0
        %626 = vmatpush1.bf16.xpose.msra.mxu0 %v531
        %627 = vmatprep.subr.bf16.mxu0 0
        %628 = vmatpush1.bf16.xpose.msra.mxu0 %v528
        %629 = vmatprep.subr.bf16.mxu0 0
        %630 = vmatpush1.bf16.xpose.msra.mxu0 %v525
        %631 = vmatprep.subr.bf16.mxu0 0
        %632 = vmatpush1.bf16.xpose.msra.mxu0 %v522
        %633 = vmatprep.subr.bf16.mxu0 0
        %634 = vmatpush2.bf16.xpose.msra.mxu0 %v567
        %635 = vmatprep.subr.bf16.mxu0 0
        %636 = vmatpush2.bf16.xpose.msra.mxu0 %v564
        %637 = vmatprep.subr.bf16.mxu0 0
        %638 = vmatpush2.bf16.xpose.msra.mxu0 %v561
        %639 = vmatprep.subr.bf16.mxu0 0
        %640 = vmatpush2.bf16.xpose.msra.mxu0 %v558
        %641 = vmatprep.subr.bf16.mxu0 0
        %642 = vmatpush2.bf16.xpose.msra.mxu0 %v555
        %643 = vmatprep.subr.bf16.mxu0 0
        %644 = vmatpush2.bf16.xpose.msra.mxu0 %v552
        %645 = vmatprep.subr.bf16.mxu0 0
        %646 = vmatpush2.bf16.xpose.msra.mxu0 %v549
        %647 = vmatprep.subr.bf16.mxu0 0
        %648 = vmatpush2.bf16.xpose.msra.mxu0 %v546
        %649 = vmatprep.mubr.bf16.mxu0 0
        %650 = vmatmul.mubr.bf16.gmra.mxu0 %v498
        %v651 = vpop.f32.mrf.mxu0
        %v652 = vadd.f32 %v379, %v651
        %v653 = vpop.f32.mrf.mxu0
        %v654 = vadd.f32 %v379, %v653
        %v655 = vpop.f32.mrf.mxu0
        %v656 = vadd.f32 %v384, %v655
        %v657 = vpop.f32.mrf.mxu0
        %v658 = vadd.f32 %v384, %v657
        %659 = vmatprep.mubr.bf16.mxu0 0
        %660 = vmatmul.mubr.bf16.gmra.mxu0 %v501
        %v661 = vpop.f32.mrf.mxu0
        %v662 = vadd.f32 %v389, %v661
        %v663 = vpop.f32.mrf.mxu0
        %v664 = vadd.f32 %v389, %v663
        %v665 = vpop.f32.mrf.mxu0
        %v666 = vadd.f32 %v394, %v665
        %v667 = vpop.f32.mrf.mxu0
        %v668 = vadd.f32 %v394, %v667
        %669 = vmatprep.mubr.bf16.mxu0 0
        %670 = vmatmul.mubr.bf16.gmra.mxu0 %v504
        %v671 = vpop.f32.mrf.mxu0
        %v672 = vadd.f32 %v399, %v671
        %v673 = vpop.f32.mrf.mxu0
        %v674 = vadd.f32 %v399, %v673
        %v675 = vpop.f32.mrf.mxu0
        %v676 = vadd.f32 %v404, %v675
        %v677 = vpop.f32.mrf.mxu0
        %v678 = vadd.f32 %v404, %v677
        %679 = vmatprep.mubr.bf16.mxu0 0
        %680 = vmatmul.mubr.bf16.gmra.mxu0 %v507
        %v681 = vpop.f32.mrf.mxu0
        %v682 = vadd.f32 %v409, %v681
        %v683 = vpop.f32.mrf.mxu0
        %v684 = vadd.f32 %v409, %v683
        %v685 = vpop.f32.mrf.mxu0
        %v686 = vadd.f32 %v414, %v685
        %v687 = vpop.f32.mrf.mxu0
        %v688 = vadd.f32 %v414, %v687
        %689 = vmatprep.mubr.bf16.mxu0 0
        %690 = vmatmul.mubr.bf16.gmra.mxu0 %v510
        %v691 = vpop.f32.mrf.mxu0
        %v692 = vadd.f32 %v419, %v691
        %v693 = vpop.f32.mrf.mxu0
        %v694 = vadd.f32 %v419, %v693
        %v695 = vpop.f32.mrf.mxu0
        %v696 = vadd.f32 %v424, %v695
        %v697 = vpop.f32.mrf.mxu0
        %v698 = vadd.f32 %v424, %v697
        %699 = vmatprep.mubr.bf16.mxu0 0
        %700 = vmatmul.mubr.bf16.gmra.mxu0 %v513
        %v701 = vpop.f32.mrf.mxu0
        %v702 = vadd.f32 %v429, %v701
        %v703 = vpop.f32.mrf.mxu0
        %v704 = vadd.f32 %v429, %v703
        %v705 = vpop.f32.mrf.mxu0
        %v706 = vadd.f32 %v434, %v705
        %v707 = vpop.f32.mrf.mxu0
        %v708 = vadd.f32 %v434, %v707
        %709 = vmatprep.mubr.bf16.mxu0 0
        %710 = vmatmul.mubr.bf16.gmra.mxu0 %v516
        %v711 = vpop.f32.mrf.mxu0
        %v712 = vadd.f32 %v439, %v711
        %v713 = vpop.f32.mrf.mxu0
        %v714 = vadd.f32 %v439, %v713
        %v715 = vpop.f32.mrf.mxu0
        %v716 = vadd.f32 %v444, %v715
        %v717 = vpop.f32.mrf.mxu0
        %v718 = vadd.f32 %v444, %v717
        %719 = vmatprep.mubr.bf16.mxu0 0
        %720 = vmatmul.mubr.bf16.gmra.mxu0 %v519
        %v721 = vpop.f32.mrf.mxu0
        %v722 = vadd.f32 %v449, %v721
        %v723 = vpop.f32.mrf.mxu0
        %v724 = vadd.f32 %v449, %v723
        %v725 = vpop.f32.mrf.mxu0
        %v726 = vadd.f32 %v454, %v725
        %v727 = vpop.f32.mrf.mxu0
        %v728 = vadd.f32 %v454, %v727
        %729 = vdwg.mxu0
        %730 = vmatprep.subr.bf16.mxu0 0
        %731 = vmatpush1.bf16.xpose.msra.mxu0 %v591
        %732 = vmatprep.subr.bf16.mxu0 0
        %733 = vmatpush1.bf16.xpose.msra.mxu0 %v588
        %734 = vmatprep.subr.bf16.mxu0 0
        %735 = vmatpush1.bf16.xpose.msra.mxu0 %v585
        %736 = vmatprep.subr.bf16.mxu0 0
        %737 = vmatpush1.bf16.xpose.msra.mxu0 %v582
        %738 = vmatprep.subr.bf16.mxu0 0
        %739 = vmatpush1.bf16.xpose.msra.mxu0 %v579
        %740 = vmatprep.subr.bf16.mxu0 0
        %741 = vmatpush1.bf16.xpose.msra.mxu0 %v576
        %742 = vmatprep.subr.bf16.mxu0 0
        %743 = vmatpush1.bf16.xpose.msra.mxu0 %v573
        %744 = vmatprep.subr.bf16.mxu0 0
        %745 = vmatpush1.bf16.xpose.msra.mxu0 %v570
        %746 = vmatprep.subr.bf16.mxu0 0
        %747 = vmatpush2.bf16.xpose.msra.mxu0 %v615
        %748 = vmatprep.subr.bf16.mxu0 0
        %749 = vmatpush2.bf16.xpose.msra.mxu0 %v612
        %750 = vmatprep.subr.bf16.mxu0 0
        %751 = vmatpush2.bf16.xpose.msra.mxu0 %v609
        %752 = vmatprep.subr.bf16.mxu0 0
        %753 = vmatpush2.bf16.xpose.msra.mxu0 %v606
        %754 = vmatprep.subr.bf16.mxu0 0
        %755 = vmatpush2.bf16.xpose.msra.mxu0 %v603
        %756 = vmatprep.subr.bf16.mxu0 0
        %757 = vmatpush2.bf16.xpose.msra.mxu0 %v600
        %758 = vmatprep.subr.bf16.mxu0 0
        %759 = vmatpush2.bf16.xpose.msra.mxu0 %v597
        %760 = vmatprep.subr.bf16.mxu0 0
        %761 = vmatpush2.bf16.xpose.msra.mxu0 %v594
        %762 = vmatprep.mubr.bf16.mxu0 0
        %763 = vmatmul.mubr.bf16.gmra.mxu0 %v498
        %v764 = vpop.f32.mrf.mxu0
        %v765 = vadd.f32 %v379, %v764
        %v766 = vpop.f32.mrf.mxu0
        %v767 = vadd.f32 %v379, %v766
        %v768 = vpop.f32.mrf.mxu0
        %v769 = vadd.f32 %v384, %v768
        %v770 = vpop.f32.mrf.mxu0
        %v771 = vadd.f32 %v384, %v770
        %772 = vmatprep.mubr.bf16.mxu0 0
        %773 = vmatmul.mubr.bf16.gmra.mxu0 %v501
        %v774 = vpop.f32.mrf.mxu0
        %v775 = vadd.f32 %v389, %v774
        %v776 = vpop.f32.mrf.mxu0
        %v777 = vadd.f32 %v389, %v776
        %v778 = vpop.f32.mrf.mxu0
        %v779 = vadd.f32 %v394, %v778
        %v780 = vpop.f32.mrf.mxu0
        %v781 = vadd.f32 %v394, %v780
        %782 = vmatprep.mubr.bf16.mxu0 0
        %783 = vmatmul.mubr.bf16.gmra.mxu0 %v504
        %v784 = vpop.f32.mrf.mxu0
        %v785 = vadd.f32 %v399, %v784
        %v786 = vpop.f32.mrf.mxu0
        %v787 = vadd.f32 %v399, %v786
        %v788 = vpop.f32.mrf.mxu0
        %v789 = vadd.f32 %v404, %v788
        %v790 = vpop.f32.mrf.mxu0
        %v791 = vadd.f32 %v404, %v790
        %792 = vmatprep.mubr.bf16.mxu0 0
        %793 = vmatmul.mubr.bf16.gmra.mxu0 %v507
        %v794 = vpop.f32.mrf.mxu0
        %v795 = vadd.f32 %v409, %v794
        %v796 = vpop.f32.mrf.mxu0
        %v797 = vadd.f32 %v409, %v796
        %v798 = vpop.f32.mrf.mxu0
        %v799 = vadd.f32 %v414, %v798
        %v800 = vpop.f32.mrf.mxu0
        %v801 = vadd.f32 %v414, %v800
        %802 = vmatprep.mubr.bf16.mxu0 0
        %803 = vmatmul.mubr.bf16.gmra.mxu0 %v510
        %v804 = vpop.f32.mrf.mxu0
        %v805 = vadd.f32 %v419, %v804
        %v806 = vpop.f32.mrf.mxu0
        %v807 = vadd.f32 %v419, %v806
        %v808 = vpop.f32.mrf.mxu0
        %v809 = vadd.f32 %v424, %v808
        %v810 = vpop.f32.mrf.mxu0
        %v811 = vadd.f32 %v424, %v810
        %812 = vmatprep.mubr.bf16.mxu0 0
        %813 = vmatmul.mubr.bf16.gmra.mxu0 %v513
        %v814 = vpop.f32.mrf.mxu0
        %v815 = vadd.f32 %v429, %v814
        %v816 = vpop.f32.mrf.mxu0
        %v817 = vadd.f32 %v429, %v816
        %v818 = vpop.f32.mrf.mxu0
        %v819 = vadd.f32 %v434, %v818
        %v820 = vpop.f32.mrf.mxu0
        %v821 = vadd.f32 %v434, %v820
        %822 = vmatprep.mubr.bf16.mxu0 0
        %823 = vmatmul.mubr.bf16.gmra.mxu0 %v516
        %v824 = vpop.f32.mrf.mxu0
        %v825 = vadd.f32 %v439, %v824
        %v826 = vpop.f32.mrf.mxu0
        %v827 = vadd.f32 %v439, %v826
        %v828 = vpop.f32.mrf.mxu0
        %v829 = vadd.f32 %v444, %v828
        %v830 = vpop.f32.mrf.mxu0
        %v831 = vadd.f32 %v444, %v830
        %832 = vmatprep.mubr.bf16.mxu0 0
        %833 = vmatmul.mubr.bf16.gmra.mxu0 %v519
        %v834 = vpop.f32.mrf.mxu0
        %v835 = vadd.f32 %v449, %v834
        %v836 = vpop.f32.mrf.mxu0
        %v837 = vadd.f32 %v449, %v836
        %v838 = vpop.f32.mrf.mxu0
        %v839 = vadd.f32 %v454, %v838
        %v840 = vpop.f32.mrf.mxu0
        %v841 = vadd.f32 %v454, %v840
        %842 = vdwg.mxu0
        %v843 = vmax.f32 %v652, 0.0
        %v844 = vmax.f32 %v654, 0.0
        %v845 = vmax.f32 %v765, 0.0
        %v846 = vmax.f32 %v767, 0.0
        %v847 = vmax.f32 %v656, 0.0
        %v848 = vmax.f32 %v658, 0.0
        %v849 = vmax.f32 %v769, 0.0
        %v850 = vmax.f32 %v771, 0.0
        %v851 = vmax.f32 %v662, 0.0
        %v852 = vmax.f32 %v664, 0.0
        %v853 = vmax.f32 %v775, 0.0
        %v854 = vmax.f32 %v777, 0.0
        %v855 = vmax.f32 %v666, 0.0
        %v856 = vmax.f32 %v668, 0.0
        %v857 = vmax.f32 %v779, 0.0
        %v858 = vmax.f32 %v781, 0.0
        %v859 = vmax.f32 %v672, 0.0
        %v860 = vmax.f32 %v674, 0.0
        %v861 = vmax.f32 %v785, 0.0
        %v862 = vmax.f32 %v787, 0.0
        %v863 = vmax.f32 %v676, 0.0
        %v864 = vmax.f32 %v678, 0.0
        %v865 = vmax.f32 %v789, 0.0
        %v866 = vmax.f32 %v791, 0.0
        %v867 = vmax.f32 %v682, 0.0
        %v868 = vmax.f32 %v684, 0.0
        %v869 = vmax.f32 %v795, 0.0
        %v870 = vmax.f32 %v797, 0.0
        %v871 = vmax.f32 %v686, 0.0
        %v872 = vmax.f32 %v688, 0.0
        %v873 = vmax.f32 %v799, 0.0
        %v874 = vmax.f32 %v801, 0.0
        %v875 = vmax.f32 %v692, 0.0
        %v876 = vmax.f32 %v694, 0.0
        %v877 = vmax.f32 %v805, 0.0
        %v878 = vmax.f32 %v807, 0.0
        %v879 = vmax.f32 %v696, 0.0
        %v880 = vmax.f32 %v698, 0.0
        %v881 = vmax.f32 %v809, 0.0
        %v882 = vmax.f32 %v811, 0.0
        %v883 = vmax.f32 %v702, 0.0
        %v884 = vmax.f32 %v704, 0.0
        %v885 = vmax.f32 %v815, 0.0
        %v886 = vmax.f32 %v817, 0.0
        %v887 = vmax.f32 %v706, 0.0
        %v888 = vmax.f32 %v708, 0.0
        %v889 = vmax.f32 %v819, 0.0
        %v890 = vmax.f32 %v821, 0.0
        %v891 = vmax.f32 %v712, 0.0
        %v892 = vmax.f32 %v714, 0.0
        %v893 = vmax.f32 %v825, 0.0
        %v894 = vmax.f32 %v827, 0.0
        %v895 = vmax.f32 %v716, 0.0
        %v896 = vmax.f32 %v718, 0.0
        %v897 = vmax.f32 %v829, 0.0
        %v898 = vmax.f32 %v831, 0.0
        %v899 = vmax.f32 %v722, 0.0
        %v900 = vmax.f32 %v724, 0.0
        %v901 = vmax.f32 %v835, 0.0
        %v902 = vmax.f32 %v837, 0.0
        %v903 = vmax.f32 %v726, 0.0
        %v904 = vmax.f32 %v728, 0.0
        %v905 = vmax.f32 %v839, 0.0
        %v906 = vmax.f32 %v841, 0.0
        %v907 = vld [vmem:[%s3] sm:$0xff]
        %v908 = vld [vmem:[%s3 + $0x8] sm:$0xff]
        %v909 = vld [vmem:[%s3 + $0x10] sm:$0xff]
        %v910 = vld [vmem:[%s3 + $0x18] sm:$0xff]
        %v911 = vld [vmem:[%s3 + $0x20] sm:$0xff]
        %v912 = vld [vmem:[%s3 + $0x28] sm:$0xff]
        %v913 = vld [vmem:[%s3 + $0x30] sm:$0xff]
        %v914 = vld [vmem:[%s3 + $0x38] sm:$0xff]
        %v915 = vld [vmem:[%s3 + $0x40] sm:$0xff]
        %v916 = vld [vmem:[%s3 + $0x48] sm:$0xff]
        %v917 = vld [vmem:[%s3 + $0x50] sm:$0xff]
        %v918 = vld [vmem:[%s3 + $0x58] sm:$0xff]
        %v919 = vld [vmem:[%s3 + $0x60] sm:$0xff]
        %v920 = vld [vmem:[%s3 + $0x68] sm:$0xff]
        %v921 = vld [vmem:[%s3 + $0x70] sm:$0xff]
        %v922 = vld [vmem:[%s3 + $0x78] sm:$0xff]
        %924 = vset.pattern.permute.xlu0 0
        %925 = vperm.xlu0 %924, %v907
        %v926 = vpop.permute.xlu0 %925
        %929 = vset.pattern.permute.xlu0 0
        %930 = vperm.xlu0 %929, %v908
        %v931 = vpop.permute.xlu0 %930
        %934 = vset.pattern.permute.xlu0 0
        %935 = vperm.xlu0 %934, %v909
        %v936 = vpop.permute.xlu0 %935
        %939 = vset.pattern.permute.xlu0 0
        %940 = vperm.xlu0 %939, %v910
        %v941 = vpop.permute.xlu0 %940
        %944 = vset.pattern.permute.xlu0 0
        %945 = vperm.xlu0 %944, %v911
        %v946 = vpop.permute.xlu0 %945
        %949 = vset.pattern.permute.xlu0 0
        %950 = vperm.xlu0 %949, %v912
        %v951 = vpop.permute.xlu0 %950
        %954 = vset.pattern.permute.xlu0 0
        %955 = vperm.xlu0 %954, %v913
        %v956 = vpop.permute.xlu0 %955
        %959 = vset.pattern.permute.xlu0 0
        %960 = vperm.xlu0 %959, %v914
        %v961 = vpop.permute.xlu0 %960
        %964 = vset.pattern.permute.xlu0 0
        %965 = vperm.xlu0 %964, %v915
        %v966 = vpop.permute.xlu0 %965
        %969 = vset.pattern.permute.xlu0 0
        %970 = vperm.xlu0 %969, %v916
        %v971 = vpop.permute.xlu0 %970
        %974 = vset.pattern.permute.xlu0 0
        %975 = vperm.xlu0 %974, %v917
        %v976 = vpop.permute.xlu0 %975
        %979 = vset.pattern.permute.xlu0 0
        %980 = vperm.xlu0 %979, %v918
        %v981 = vpop.permute.xlu0 %980
        %984 = vset.pattern.permute.xlu0 0
        %985 = vperm.xlu0 %984, %v919
        %v986 = vpop.permute.xlu0 %985
        %989 = vset.pattern.permute.xlu0 0
        %990 = vperm.xlu0 %989, %v920
        %v991 = vpop.permute.xlu0 %990
        %994 = vset.pattern.permute.xlu0 0
        %995 = vperm.xlu0 %994, %v921
        %v996 = vpop.permute.xlu0 %995
        %999 = vset.pattern.permute.xlu0 0
        %1000 = vperm.xlu0 %999, %v922
        %v1001 = vpop.permute.xlu0 %1000
        %v1003 = vmul.f32 %v843, %v926
        %v1004 = vmul.f32 %v844, %v926
        %v1005 = vmul.f32 %v845, %v926
        %v1006 = vmul.f32 %v846, %v926
        %v1007 = vmul.f32 %v847, %v931
        %v1008 = vmul.f32 %v848, %v931
        %v1009 = vmul.f32 %v849, %v931
        %v1010 = vmul.f32 %v850, %v931
        %v1011 = vmul.f32 %v851, %v936
        %v1012 = vmul.f32 %v852, %v936
        %v1013 = vmul.f32 %v853, %v936
        %v1014 = vmul.f32 %v854, %v936
        %v1015 = vmul.f32 %v855, %v941
        %v1016 = vmul.f32 %v856, %v941
        %v1017 = vmul.f32 %v857, %v941
        %v1018 = vmul.f32 %v858, %v941
        %v1019 = vmul.f32 %v859, %v946
        %v1020 = vmul.f32 %v860, %v946
        %v1021 = vmul.f32 %v861, %v946
        %v1022 = vmul.f32 %v862, %v946
        %v1023 = vmul.f32 %v863, %v951
        %v1024 = vmul.f32 %v864, %v951
        %v1025 = vmul.f32 %v865, %v951
        %v1026 = vmul.f32 %v866, %v951
        %v1027 = vmul.f32 %v867, %v956
        %v1028 = vmul.f32 %v868, %v956
        %v1029 = vmul.f32 %v869, %v956
        %v1030 = vmul.f32 %v870, %v956
        %v1031 = vmul.f32 %v871, %v961
        %v1032 = vmul.f32 %v872, %v961
        %v1033 = vmul.f32 %v873, %v961
        %v1034 = vmul.f32 %v874, %v961
        %v1035 = vmul.f32 %v875, %v966
        %v1036 = vmul.f32 %v876, %v966
        %v1037 = vmul.f32 %v877, %v966
        %v1038 = vmul.f32 %v878, %v966
        %v1039 = vmul.f32 %v879, %v971
        %v1040 = vmul.f32 %v880, %v971
        %v1041 = vmul.f32 %v881, %v971
        %v1042 = vmul.f32 %v882, %v971
        %v1043 = vmul.f32 %v883, %v976
        %v1044 = vmul.f32 %v884, %v976
        %v1045 = vmul.f32 %v885, %v976
        %v1046 = vmul.f32 %v886, %v976
        %v1047 = vmul.f32 %v887, %v981
        %v1048 = vmul.f32 %v888, %v981
        %v1049 = vmul.f32 %v889, %v981
        %v1050 = vmul.f32 %v890, %v981
        %v1051 = vmul.f32 %v891, %v986
        %v1052 = vmul.f32 %v892, %v986
        %v1053 = vmul.f32 %v893, %v986
        %v1054 = vmul.f32 %v894, %v986
        %v1055 = vmul.f32 %v895, %v991
        %v1056 = vmul.f32 %v896, %v991
        %v1057 = vmul.f32 %v897, %v991
        %v1058 = vmul.f32 %v898, %v991
        %v1059 = vmul.f32 %v899, %v996
        %v1060 = vmul.f32 %v900, %v996
        %v1061 = vmul.f32 %v901, %v996
        %v1062 = vmul.f32 %v902, %v996
        %v1063 = vmul.f32 %v903, %v1001
        %v1064 = vmul.f32 %v904, %v1001
        %v1065 = vmul.f32 %v905, %v1001
        %v1066 = vmul.f32 %v906, %v1001
        %v1067 = vadd.f32 %v1003, %v1007
        %v1068 = vadd.f32 %v1067, %v1011
        %v1069 = vadd.f32 %v1068, %v1015
        %v1070 = vadd.f32 %v1069, %v1019
        %v1071 = vadd.f32 %v1070, %v1023
        %v1072 = vadd.f32 %v1071, %v1027
        %v1073 = vadd.f32 %v1072, %v1031
        %v1074 = vadd.f32 %v1073, %v1035
        %v1075 = vadd.f32 %v1074, %v1039
        %v1076 = vadd.f32 %v1075, %v1043
        %v1077 = vadd.f32 %v1076, %v1047
        %v1078 = vadd.f32 %v1077, %v1051
        %v1079 = vadd.f32 %v1078, %v1055
        %v1080 = vadd.f32 %v1079, %v1059
        %v1081 = vadd.f32 %v1080, %v1063
        %v1082 = vrot.slane %v1081, 4
        %v1083 = vadd.f32 %v1081, %v1082
        %v1084 = vrot.slane %v1083, 2
        %v1085 = vadd.f32 %v1083, %v1084
        %v1086 = vrot.slane %v1085, 1
        %v1087 = vadd.f32 %v1085, %v1086
        %v1088 = vadd.f32 %v1004, %v1008
        %v1089 = vadd.f32 %v1088, %v1012
        %v1090 = vadd.f32 %v1089, %v1016
        %v1091 = vadd.f32 %v1090, %v1020
        %v1092 = vadd.f32 %v1091, %v1024
        %v1093 = vadd.f32 %v1092, %v1028
        %v1094 = vadd.f32 %v1093, %v1032
        %v1095 = vadd.f32 %v1094, %v1036
        %v1096 = vadd.f32 %v1095, %v1040
        %v1097 = vadd.f32 %v1096, %v1044
        %v1098 = vadd.f32 %v1097, %v1048
        %v1099 = vadd.f32 %v1098, %v1052
        %v1100 = vadd.f32 %v1099, %v1056
        %v1101 = vadd.f32 %v1100, %v1060
        %v1102 = vadd.f32 %v1101, %v1064
        %v1103 = vrot.slane %v1102, 4
        %v1104 = vadd.f32 %v1102, %v1103
        %v1105 = vrot.slane %v1104, 2
        %v1106 = vadd.f32 %v1104, %v1105
        %v1107 = vrot.slane %v1106, 1
        %v1108 = vadd.f32 %v1106, %v1107
        %v1109 = vadd.f32 %v1005, %v1009
        %v1110 = vadd.f32 %v1109, %v1013
        %v1111 = vadd.f32 %v1110, %v1017
        %v1112 = vadd.f32 %v1111, %v1021
        %v1113 = vadd.f32 %v1112, %v1025
        %v1114 = vadd.f32 %v1113, %v1029
        %v1115 = vadd.f32 %v1114, %v1033
        %v1116 = vadd.f32 %v1115, %v1037
        %v1117 = vadd.f32 %v1116, %v1041
        %v1118 = vadd.f32 %v1117, %v1045
        %v1119 = vadd.f32 %v1118, %v1049
        %v1120 = vadd.f32 %v1119, %v1053
        %v1121 = vadd.f32 %v1120, %v1057
        %v1122 = vadd.f32 %v1121, %v1061
        %v1123 = vadd.f32 %v1122, %v1065
        %v1124 = vrot.slane %v1123, 4
        %v1125 = vadd.f32 %v1123, %v1124
        %v1126 = vrot.slane %v1125, 2
        %v1127 = vadd.f32 %v1125, %v1126
        %v1128 = vrot.slane %v1127, 1
        %v1129 = vadd.f32 %v1127, %v1128
        %v1130 = vadd.f32 %v1006, %v1010
        %v1131 = vadd.f32 %v1130, %v1014
        %v1132 = vadd.f32 %v1131, %v1018
        %v1133 = vadd.f32 %v1132, %v1022
        %v1134 = vadd.f32 %v1133, %v1026
        %v1135 = vadd.f32 %v1134, %v1030
        %v1136 = vadd.f32 %v1135, %v1034
        %v1137 = vadd.f32 %v1136, %v1038
        %v1138 = vadd.f32 %v1137, %v1042
        %v1139 = vadd.f32 %v1138, %v1046
        %v1140 = vadd.f32 %v1139, %v1050
        %v1141 = vadd.f32 %v1140, %v1054
        %v1142 = vadd.f32 %v1141, %v1058
        %v1143 = vadd.f32 %v1142, %v1062
        %v1144 = vadd.f32 %v1143, %v1066
        %v1145 = vrot.slane %v1144, 4
        %v1146 = vadd.f32 %v1144, %v1145
        %v1147 = vrot.slane %v1146, 2
        %v1148 = vadd.f32 %v1146, %v1147
        %v1149 = vrot.slane %v1148, 1
        %v1150 = vadd.f32 %v1148, %v1149
        %s1151 = sld [smem:[#allocation2]]
        %v1152 = vstv %s1151
        %v1153 = vadd.f32 %v1087, %v1152
        %v1154 = vadd.f32 %v1108, %v1152
        %v1155 = vadd.f32 %v1129, %v1152
        %v1156 = vadd.f32 %v1150, %v1152
        %v1161 = vcombine.low %v1153, %v1154
        %v1162 = vcombine.low %v1155, %v1156
        %v1164 = vunpack.c.l.s4 1966171168
        %v1165 = vunpack.c.0.s8 %v1164
        %v1166 = vlaneseq
        %v1167 = vshrl.u32 %v1166, 7
        %v1168 = vsub.s32 %v1165, %v1167
        %v1169 = vrot.slane %v1161, %v1168
        %v1171 = vunpack.c.l.s4 1966171168
        %v1172 = vunpack.c.0.s8 %v1171
        %v1173 = vlaneseq
        %v1174 = vshrl.u32 %v1173, 7
        %v1175 = vsub.s32 %v1172, %v1174
        %v1176 = vrot.slane %v1162, %v1175
        %v1177 = vcombine.low %v1169, %v1176
        %v1179 = vunpack.c.l.s4 1966171168
        %v1180 = vunpack.c.0.s8 %v1179
        %v1181 = vlaneseq
        %v1182 = vshrl.u32 %v1181, 7
        %v1183 = vsub.s32 %v1180, %v1182
        %v1184 = vrot.slane %v1177, %v1183
        %v1186 = vlaneseq
        %vm1187 = vcmp.ge.s32.totalorder %v1186, 0
        %vm1188 = vcmp.lt.s32.totalorder %v1186, 512
        %vm1189 = vmand %vm1187, %vm1188
        %1190 = vst.msk [vmem:[%s231] sm:$0xf] %vm1189, %v1184
        %s1191 = sand.u32 %s138, 1
        %s1192 = scalar_lea.sflag [#allocation4], %s1191
        %s1193 = sand.u32 %s138, 1
        %s1194 = smul.addr %s1193, 4
        %s1195 = scalar_lea.vmem [#allocation3], %s1194
        // Predicated region
        $region41: #{tpu_custom_call.1} parent=39 // pred_check
          %p1196 = pneg %p148
        $region42: #{tpu_custom_call.1} parent=39 // pred_check_branch
          %1198 = sbr.rel (%p1196) target = $region44
        $region43: #{tpu_custom_call.1} parent=39 // pred_region
          %s1199 = smul.u32 4, %s20
          %s1201 = ssub.s32 64, 64
          %1202 = vsyncadd %s1192, %s1201
          %s1203 = smul.addr %s1199, 16
          %s1204 = scalar_lea.hbm %s5, %s1203
          %s1206 = sshll.u32 %s1195, 4
          %s1207 = int_to_ptr.vmem [resolvable:$true] %s1206
          %1209 = dma.vmem_to_hbm [thread:$0]  %s1207, 64, %s1204, %s1192
        $region44: #{tpu_custom_call.1} parent=39 // pred_fallthru
          _
      $region40: #{tpu_custom_call.1} parent=5 // pred_fallthru
        _
      %p1210 = scmp.le.s32.totalorder 2, %s15
      // Predicated region
      $region45: #{tpu_custom_call.1} parent=5 // pred_check
        %p1211 = pneg %p1210
      $region46: #{tpu_custom_call.1} parent=5 // pred_check_branch
        %1213 = sbr.rel (%p1211) target = $region48
      $region47: #{tpu_custom_call.1} parent=5 // pred_region
        %s1214 = ssub.s32 %s15, 2
        // Predicated region
        $region49: #{tpu_custom_call.1} parent=47 // pred_check
          %p1215 = pneg %p154
        $region50: #{tpu_custom_call.1} parent=47 // pred_check_branch
          %1217 = sbr.rel (%p1215) target = $region52
        $region51: #{tpu_custom_call.1} parent=47 // pred_region
          %s1218 = sand.u32 %s139, 1
          %s1219 = scalar_lea.sflag [#allocation4], %s1218
          %s1220 = sand.u32 %s139, 1
          %s1221 = smul.addr %s1220, 4
          %s1222 = scalar_lea.vmem [#allocation3], %s1221
          %1223 = dma.done %s1219, 64
        $region52: #{tpu_custom_call.1} parent=47 // pred_fallthru
          _
      $region48: #{tpu_custom_call.1} parent=5 // pred_fallthru
        _
    $region6: #{tpu_custom_call.1} parent=1 // loop_footer
      %s19 = sadd.s32 1, %s15
    $region7: #{tpu_custom_call.1} parent=1 // loop_footer_branch
      %14 = sbr.rel target = $region3
    $region8: #{tpu_custom_call.1} parent=1 // loop_exit
      _
    %1224 = vsyncpa [#allocation4], 1
    %s1225 = scalar_lea.sflag [#allocation4], 1
    %1226 = vsyncpa %s1225, 1

</llo_original>
